<compile_context>
chip_gen: v6e
topology: v6e:2x2x1
jax: 0.10.0
libtpu: 0.0.40
codegen_flags: <defaults>
</compile_context>

<pallas_src>
import jax
import jax.numpy as jnp
from jax.experimental import pallas as pl
from jax.experimental.pallas import tpu as pltpu


def bilinear_softmax_kernel(x1_ref, x2_ref, wt_ref, b_ref, o_ref):
    """hidden[b,k] = bias[k] + sum_j (x1 @ Wt)[b, k*D+j] * x2[b,j]; softmax over k."""
    x1 = x1_ref[...]                       # (bt, D)
    x2 = x2_ref[...]                       # (bt, D)
    bt, d = x1.shape
    c = b_ref.shape[-1]

    # Single fused MXU matmul over ALL classes: (bt, D) @ (D, C*D) -> (bt, C*D).
    u = jnp.dot(x1, wt_ref[...], preferred_element_type=jnp.float32)

    # Assemble hidden (bt, C) purely in vregs: per-class static lane slice of u,
    # multiply by x2, lane-reduce, and scatter into class lane k via an iota mask.
    # (No VMEM scratch, no masked stores; C is small and static so this unrolls.)
    lane = jax.lax.broadcasted_iota(jnp.int32, (bt, c), 1)
    hidden = jnp.zeros((bt, c), jnp.float32)
    for k in range(c):
        col = jnp.sum(u[:, k * d:(k + 1) * d] * x2, axis=-1, keepdims=True)  # (bt, 1)
        hidden = hidden + (lane == k).astype(jnp.float32) * col
    hidden = hidden + b_ref[...].astype(jnp.float32)                         # (bt, C)

    # Softmax over the class axis (torch Softmax() -> dim=1 on 2-D input).
    m = jnp.max(hidden, axis=-1, keepdims=True)
    e = jnp.exp(hidden - m)
    inv = pl.reciprocal(jnp.sum(e, axis=-1, keepdims=True), approx=True)
    o_ref[...] = (e * inv).astype(o_ref.dtype)


def _pick_batch_tile(batch):
    for cand in (256, 128, 64, 32, 16, 8):
        if batch % cand == 0:
            return cand
    return batch  # small batch: block == full array satisfies tiling rules


def bilinear_softmax(ctx_embed, hyp_embed, weight, bias):
    """Pallas wrapper: batch-tiled grid; weight pre-flattened so the kernel does one matmul."""
    B, D = ctx_embed.shape
    C = weight.shape[0]
    # Fuse the class axis into the matmul's N dimension: Wt[i, k*D + j] = W[k, i, j].
    wt = jnp.transpose(weight, (1, 0, 2)).reshape(D, C * D)
    bias2d = bias.reshape(1, C)

    bt = _pick_batch_tile(B)
    grid = (B // bt,)
    return pl.pallas_call(
        bilinear_softmax_kernel,
        out_shape=jax.ShapeDtypeStruct((B, C), jnp.float32),
        grid=grid,
        in_specs=[
            pl.BlockSpec((bt, D), lambda b: (b, 0)),
            pl.BlockSpec((bt, D), lambda b: (b, 0)),
            pl.BlockSpec((D, C * D), lambda b: (0, 0)),   # weight resident across batch steps
            pl.BlockSpec((1, C), lambda b: (0, 0)),
        ],
        out_specs=pl.BlockSpec((bt, C), lambda b: (b, 0)),
        compiler_params=pltpu.CompilerParams(
            dimension_semantics=("parallel",),            # v7x: split batch across TCs
            vmem_limit_bytes=32 * 1024 * 1024,
        ),
    )(ctx_embed, hyp_embed, wt, bias2d)


def stub_encoder_pooler(input_ids, attention_mask, *, embed_table, pool_w, pool_b):
    # TODO(synk): real transformer encoder is an external module with no Pallas
    # equivalent here; this deterministic embed + masked-mean + tanh(dense) stands
    # in for `encoder(**x).pooler_output`.
    tok = embed_table[input_ids]                                   # (B, S, D)
    mask = attention_mask[..., None].astype(tok.dtype)             # (B, S, 1)
    mean = (tok * mask).sum(axis=1) / jnp.maximum(mask.sum(axis=1), 1.0)
    return jnp.tanh(mean @ pool_w + pool_b)                        # (B, D)


if __name__ == "__main__":
    key = jax.random.PRNGKey(0)
    B, S, D, C, V = 2, 8, 32, 8, 50   # batch, seq, embedding_dim, class_ct, vocab
    k1, k2, k3, k4, k5, k6 = jax.random.split(key, 6)

    # deterministic parameters (Bilinear: weight (C, D, D), bias (C,))
    embed_table = jax.random.normal(k1, (V, D), jnp.float32) * 0.02
    pool_w = jax.random.normal(k2, (D, D), jnp.float32) / jnp.sqrt(D)
    pool_b = jnp.zeros((D,), jnp.float32)
    bilinear_w = jax.random.normal(k3, (C, D, D), jnp.float32) / D
    bilinear_b = jax.random.normal(k4, (C,), jnp.float32) * 0.1

    context = {
        "input_ids": jax.random.randint(k5, (B, S), 0, V),
        "attention_mask": jnp.ones((B, S), jnp.int32),
    }
    hypothesis = {
        "input_ids": jax.random.randint(k6, (B, S), 0, V),
        "attention_mask": jnp.ones((B, S), jnp.int32),
    }

    ctx_embed = stub_encoder_pooler(**context, embed_table=embed_table,
                                    pool_w=pool_w, pool_b=pool_b)
    hyp_embed = stub_encoder_pooler(**hypothesis, embed_table=embed_table,
                                    pool_w=pool_w, pool_b=pool_b)

    out = bilinear_softmax(ctx_embed, hyp_embed, bilinear_w, bilinear_b)
    out = jax.block_until_ready(out)

    # pure-JAX reference for the bilinear + softmax path
    hid_ref = jnp.einsum("bi,kij,bj->bk", ctx_embed, bilinear_w, hyp_embed) + bilinear_b
    ref = jax.nn.softmax(hid_ref, axis=-1)
    assert out.shape == (B, C)
    # tolerance loosened for pl.reciprocal(approx=True) in the softmax denominator
    assert jnp.allclose(out, ref, atol=2e-3, rtol=2e-3)

    print("KERNEL_OK")
</pallas_src>

<mosaic_0001>
module attributes {stable_mosaic.version = 11 : i64} {
  func.func @bilinear_softmax_kernel(%arg0: i32, %arg1: memref<2x32xf32, #tpu.memory_space<vmem>>, %arg2: memref<2x32xf32, #tpu.memory_space<vmem>>, %arg3: memref<32x256xf32, #tpu.memory_space<vmem>>, %arg4: memref<1x8xf32, #tpu.memory_space<vmem>>, %arg5: memref<2x8xf32, #tpu.memory_space<vmem>>) attributes {dimension_semantics = [#tpu.dimension_semantics<parallel>], iteration_bounds = array<i64: 1>, scalar_prefetch = 0 : i64, scratch_operands = 0 : i64, tpu.core_type = #tpu.core_type<tc>, window_params = [{transform_indices = @transform_0, window_bounds = array<i64: 2, 32>}, {transform_indices = @transform_1, window_bounds = array<i64: 2, 32>}, {pipeline_mode = #tpu.pipeline_mode<synchronous>, transform_indices = @transform_2, window_bounds = array<i64: 32, 256>}, {pipeline_mode = #tpu.pipeline_mode<synchronous>, transform_indices = @transform_3, window_bounds = array<i64: 1, 8>}, {transform_indices = @transform_4, window_bounds = array<i64: 2, 8>}]} {
    %c0 = arith.constant 0 : index
    %c0_0 = arith.constant 0 : index
    %0 = vector.load %arg1[%c0, %c0_0] : memref<2x32xf32, #tpu.memory_space<vmem>>, vector<2x32xf32>
    %c0_1 = arith.constant 0 : index
    %c0_2 = arith.constant 0 : index
    %1 = vector.load %arg2[%c0_1, %c0_2] : memref<2x32xf32, #tpu.memory_space<vmem>>, vector<2x32xf32>
    %c0_3 = arith.constant 0 : index
    %c0_4 = arith.constant 0 : index
    %2 = vector.load %arg3[%c0_3, %c0_4] : memref<32x256xf32, #tpu.memory_space<vmem>>, vector<32x256xf32>
    %cst = arith.constant dense<0.000000e+00> : vector<2x256xf32>
    %3 = tpu.matmul %0, %2, %cst {dimension_numbers = #tpu.dot_dimension_numbers<[1], [0], [0], [1], [0, 0, 1, 1], [], []>} : vector<2x32xf32>, vector<32x256xf32>, vector<2x256xf32> -> vector<2x256xf32>
    %4 = tpu.iota {dimensions = array<i32: 1>} : vector<2x8xi32>
    %cst_5 = arith.constant 0.000000e+00 : f32
    %5 = vector.broadcast %cst_5 : f32 to vector<2x8xf32>
    %6 = vector.extract_strided_slice %3 {offsets = [0, 0], sizes = [2, 32], strides = [1, 1]} : vector<2x256xf32> to vector<2x32xf32>
    %7 = arith.mulf %6, %1 : vector<2x32xf32>
    %cst_6 = arith.constant dense<0.000000e+00> : vector<2xf32>
    %8 = vector.multi_reduction <add>, %7, %cst_6 [1] : vector<2x32xf32> to vector<2xf32>
    %9 = vector.shape_cast %8 : vector<2xf32> to vector<2x1xf32>
    %c0_i32 = arith.constant 0 : i32
    %10 = vector.broadcast %c0_i32 : i32 to vector<2x8xi32>
    %11 = arith.cmpi eq, %4, %10 : vector<2x8xi32>
    %12 = arith.extui %11 : vector<2x8xi1> to vector<2x8xi32>
    %13 = arith.sitofp %12 : vector<2x8xi32> to vector<2x8xf32>
    %14 = vector.broadcast %9 : vector<2x1xf32> to vector<2x8xf32>
    %15 = arith.mulf %13, %14 : vector<2x8xf32>
    %16 = arith.addf %5, %15 : vector<2x8xf32>
    %17 = vector.extract_strided_slice %3 {offsets = [0, 32], sizes = [2, 32], strides = [1, 1]} : vector<2x256xf32> to vector<2x32xf32>
    %18 = arith.mulf %17, %1 : vector<2x32xf32>
    %cst_7 = arith.constant dense<0.000000e+00> : vector<2xf32>
    %19 = vector.multi_reduction <add>, %18, %cst_7 [1] : vector<2x32xf32> to vector<2xf32>
    %20 = vector.shape_cast %19 : vector<2xf32> to vector<2x1xf32>
    %c1_i32 = arith.constant 1 : i32
    %21 = vector.broadcast %c1_i32 : i32 to vector<2x8xi32>
    %22 = arith.cmpi eq, %4, %21 : vector<2x8xi32>
    %23 = arith.extui %22 : vector<2x8xi1> to vector<2x8xi32>
    %24 = arith.sitofp %23 : vector<2x8xi32> to vector<2x8xf32>
    %25 = vector.broadcast %20 : vector<2x1xf32> to vector<2x8xf32>
    %26 = arith.mulf %24, %25 : vector<2x8xf32>
    %27 = arith.addf %16, %26 : vector<2x8xf32>
    %28 = vector.extract_strided_slice %3 {offsets = [0, 64], sizes = [2, 32], strides = [1, 1]} : vector<2x256xf32> to vector<2x32xf32>
    %29 = arith.mulf %28, %1 : vector<2x32xf32>
    %cst_8 = arith.constant dense<0.000000e+00> : vector<2xf32>
    %30 = vector.multi_reduction <add>, %29, %cst_8 [1] : vector<2x32xf32> to vector<2xf32>
    %31 = vector.shape_cast %30 : vector<2xf32> to vector<2x1xf32>
    %c2_i32 = arith.constant 2 : i32
    %32 = vector.broadcast %c2_i32 : i32 to vector<2x8xi32>
    %33 = arith.cmpi eq, %4, %32 : vector<2x8xi32>
    %34 = arith.extui %33 : vector<2x8xi1> to vector<2x8xi32>
    %35 = arith.sitofp %34 : vector<2x8xi32> to vector<2x8xf32>
    %36 = vector.broadcast %31 : vector<2x1xf32> to vector<2x8xf32>
    %37 = arith.mulf %35, %36 : vector<2x8xf32>
    %38 = arith.addf %27, %37 : vector<2x8xf32>
    %39 = vector.extract_strided_slice %3 {offsets = [0, 96], sizes = [2, 32], strides = [1, 1]} : vector<2x256xf32> to vector<2x32xf32>
    %40 = arith.mulf %39, %1 : vector<2x32xf32>
    %cst_9 = arith.constant dense<0.000000e+00> : vector<2xf32>
    %41 = vector.multi_reduction <add>, %40, %cst_9 [1] : vector<2x32xf32> to vector<2xf32>
    %42 = vector.shape_cast %41 : vector<2xf32> to vector<2x1xf32>
    %c3_i32 = arith.constant 3 : i32
    %43 = vector.broadcast %c3_i32 : i32 to vector<2x8xi32>
    %44 = arith.cmpi eq, %4, %43 : vector<2x8xi32>
    %45 = arith.extui %44 : vector<2x8xi1> to vector<2x8xi32>
    %46 = arith.sitofp %45 : vector<2x8xi32> to vector<2x8xf32>
    %47 = vector.broadcast %42 : vector<2x1xf32> to vector<2x8xf32>
    %48 = arith.mulf %46, %47 : vector<2x8xf32>
    %49 = arith.addf %38, %48 : vector<2x8xf32>
    %50 = vector.extract_strided_slice %3 {offsets = [0, 128], sizes = [2, 32], strides = [1, 1]} : vector<2x256xf32> to vector<2x32xf32>
    %51 = arith.mulf %50, %1 : vector<2x32xf32>
    %cst_10 = arith.constant dense<0.000000e+00> : vector<2xf32>
    %52 = vector.multi_reduction <add>, %51, %cst_10 [1] : vector<2x32xf32> to vector<2xf32>
    %53 = vector.shape_cast %52 : vector<2xf32> to vector<2x1xf32>
    %c4_i32 = arith.constant 4 : i32
    %54 = vector.broadcast %c4_i32 : i32 to vector<2x8xi32>
    %55 = arith.cmpi eq, %4, %54 : vector<2x8xi32>
    %56 = arith.extui %55 : vector<2x8xi1> to vector<2x8xi32>
    %57 = arith.sitofp %56 : vector<2x8xi32> to vector<2x8xf32>
    %58 = vector.broadcast %53 : vector<2x1xf32> to vector<2x8xf32>
    %59 = arith.mulf %57, %58 : vector<2x8xf32>
    %60 = arith.addf %49, %59 : vector<2x8xf32>
    %61 = vector.extract_strided_slice %3 {offsets = [0, 160], sizes = [2, 32], strides = [1, 1]} : vector<2x256xf32> to vector<2x32xf32>
    %62 = arith.mulf %61, %1 : vector<2x32xf32>
    %cst_11 = arith.constant dense<0.000000e+00> : vector<2xf32>
    %63 = vector.multi_reduction <add>, %62, %cst_11 [1] : vector<2x32xf32> to vector<2xf32>
    %64 = vector.shape_cast %63 : vector<2xf32> to vector<2x1xf32>
    %c5_i32 = arith.constant 5 : i32
    %65 = vector.broadcast %c5_i32 : i32 to vector<2x8xi32>
    %66 = arith.cmpi eq, %4, %65 : vector<2x8xi32>
    %67 = arith.extui %66 : vector<2x8xi1> to vector<2x8xi32>
    %68 = arith.sitofp %67 : vector<2x8xi32> to vector<2x8xf32>
    %69 = vector.broadcast %64 : vector<2x1xf32> to vector<2x8xf32>
    %70 = arith.mulf %68, %69 : vector<2x8xf32>
    %71 = arith.addf %60, %70 : vector<2x8xf32>
    %72 = vector.extract_strided_slice %3 {offsets = [0, 192], sizes = [2, 32], strides = [1, 1]} : vector<2x256xf32> to vector<2x32xf32>
    %73 = arith.mulf %72, %1 : vector<2x32xf32>
    %cst_12 = arith.constant dense<0.000000e+00> : vector<2xf32>
    %74 = vector.multi_reduction <add>, %73, %cst_12 [1] : vector<2x32xf32> to vector<2xf32>
    %75 = vector.shape_cast %74 : vector<2xf32> to vector<2x1xf32>
    %c6_i32 = arith.constant 6 : i32
    %76 = vector.broadcast %c6_i32 : i32 to vector<2x8xi32>
    %77 = arith.cmpi eq, %4, %76 : vector<2x8xi32>
    %78 = arith.extui %77 : vector<2x8xi1> to vector<2x8xi32>
    %79 = arith.sitofp %78 : vector<2x8xi32> to vector<2x8xf32>
    %80 = vector.broadcast %75 : vector<2x1xf32> to vector<2x8xf32>
    %81 = arith.mulf %79, %80 : vector<2x8xf32>
    %82 = arith.addf %71, %81 : vector<2x8xf32>
    %83 = vector.extract_strided_slice %3 {offsets = [0, 224], sizes = [2, 32], strides = [1, 1]} : vector<2x256xf32> to vector<2x32xf32>
    %84 = arith.mulf %83, %1 : vector<2x32xf32>
    %cst_13 = arith.constant dense<0.000000e+00> : vector<2xf32>
    %85 = vector.multi_reduction <add>, %84, %cst_13 [1] : vector<2x32xf32> to vector<2xf32>
    %86 = vector.shape_cast %85 : vector<2xf32> to vector<2x1xf32>
    %c7_i32 = arith.constant 7 : i32
    %87 = vector.broadcast %c7_i32 : i32 to vector<2x8xi32>
    %88 = arith.cmpi eq, %4, %87 : vector<2x8xi32>
    %89 = arith.extui %88 : vector<2x8xi1> to vector<2x8xi32>
    %90 = arith.sitofp %89 : vector<2x8xi32> to vector<2x8xf32>
    %91 = vector.broadcast %86 : vector<2x1xf32> to vector<2x8xf32>
    %92 = arith.mulf %90, %91 : vector<2x8xf32>
    %93 = arith.addf %82, %92 : vector<2x8xf32>
    %c0_14 = arith.constant 0 : index
    %c0_15 = arith.constant 0 : index
    %94 = vector.load %arg4[%c0_14, %c0_15] : memref<1x8xf32, #tpu.memory_space<vmem>>, vector<1x8xf32>
    %95 = vector.broadcast %94 : vector<1x8xf32> to vector<2x8xf32>
    %96 = arith.addf %93, %95 : vector<2x8xf32>
    %cst_16 = arith.constant dense<0xFF800000> : vector<2xf32>
    %97 = vector.multi_reduction <maximumf>, %96, %cst_16 [1] : vector<2x8xf32> to vector<2xf32>
    %98 = vector.shape_cast %97 : vector<2xf32> to vector<2x1xf32>
    %99 = vector.broadcast %98 : vector<2x1xf32> to vector<2x8xf32>
    %100 = arith.subf %96, %99 : vector<2x8xf32>
    %101 = math.exp %100 : vector<2x8xf32>
    %cst_17 = arith.constant dense<0.000000e+00> : vector<2xf32>
    %102 = vector.multi_reduction <add>, %101, %cst_17 [1] : vector<2x8xf32> to vector<2xf32>
    %103 = vector.shape_cast %102 : vector<2xf32> to vector<2x1xf32>
    %104 = tpu.reciprocal %103 {approx = true} : vector<2x1xf32> -> vector<2x1xf32>
    %105 = vector.broadcast %104 : vector<2x1xf32> to vector<2x8xf32>
    %106 = arith.mulf %101, %105 : vector<2x8xf32>
    %c0_18 = arith.constant 0 : index
    %c0_19 = arith.constant 0 : index
    %107 = vector.load %arg5[%c0_18, %c0_19] : memref<2x8xf32, #tpu.memory_space<vmem>>, vector<2x8xf32>
    tpu.vector_store %arg5[%c0_18, %c0_19], %106 {strides = array<i32>} : memref<2x8xf32, #tpu.memory_space<vmem>>, vector<2x8xf32>,
    return
  }
  func.func @transform_0(%arg0: i32) -> (i32, i32) {
    %c0_i32 = arith.constant 0 : i32
    %c0_i32_0 = arith.constant 0 : i32
    return %arg0, %c0_i32 : i32, i32
  }
  func.func @transform_1(%arg0: i32) -> (i32, i32) {
    %c0_i32 = arith.constant 0 : i32
    %c0_i32_0 = arith.constant 0 : i32
    return %arg0, %c0_i32 : i32, i32
  }
  func.func @transform_2(%arg0: i32) -> (i32, i32) {
    %c0_i32 = arith.constant 0 : i32
    %c0_i32_0 = arith.constant 0 : i32
    %c0_i32_1 = arith.constant 0 : i32
    return %c0_i32, %c0_i32_0 : i32, i32
  }
  func.func @transform_3(%arg0: i32) -> (i32, i32) {
    %c0_i32 = arith.constant 0 : i32
    %c0_i32_0 = arith.constant 0 : i32
    %c0_i32_1 = arith.constant 0 : i32
    return %c0_i32, %c0_i32_0 : i32, i32
  }
  func.func @transform_4(%arg0: i32) -> (i32, i32) {
    %c0_i32 = arith.constant 0 : i32
    %c0_i32_0 = arith.constant 0 : i32
    return %arg0, %c0_i32 : i32, i32
  }
}

</mosaic_0001>

<llo_original>
// kernel: tpu_custom_call.1
$region0: #{tpu_custom_call.1}
  #allocation0 [shape = 'u32[]', space=smem, size = 0x4, offset = 0x4, fixed_abs, tag = 'smem constant byte address 0x4 - core index']
  #allocation1 [shape = 'u32[144,128]{1,0:T(1,128)}', space=vmem, size = 0x12000, scoped, tag = 'internal scratch']
  %s0 = inlined_call_operand.hbm [shape: f32[2,32], index: 0, kind: input, shape index: {}]
  %s1 = inlined_call_operand.hbm [shape: f32[2,32], index: 1, kind: input, shape index: {}]
  %s2 = inlined_call_operand.hbm [shape: f32[32,256], index: 2, kind: input, shape index: {}]
  %s3 = inlined_call_operand.vmem [shape: f32[1,8], index: 3, kind: input, shape index: {}]
  %s4 = inlined_call_operand.hbm [shape: f32[2,8], index: 4, kind: output, shape index: {}]
  %s5 = sld [smem:[#allocation0]]
  $region38: #{tpu_custom_call.1} parent=0
    _
  %s7 = ssub.s32 1, %s5
  %s8 = scalar_select 0, %s7, %s5
  $region1: #{tpu_custom_call.1} parent=0
    #allocation2 [shape = 'u8[1024]{0}', space=vmem, size = 0x400, scoped, tag = 'input window, operand 0, single buffered']
    #allocation3 [shape = 's32[1]{0}', space=sflag, size = 0x4, scoped, tag = 'scoped memory for tpu_custom_call.1']
    #allocation4 [shape = 's32[1]{0}', space=sflag, size = 0x4, scoped, tag = 'scoped memory for tpu_custom_call.1']
    #allocation5 [shape = 'u8[1024]{0}', space=vmem, size = 0x400, scoped, tag = 'input window, operand 1, single buffered']
    #allocation6 [shape = 's32[1]{0}', space=sflag, size = 0x4, scoped, tag = 'scoped memory for tpu_custom_call.1']
    #allocation7 [shape = 'u8[32768]{0}', space=vmem, size = 0x8000, scoped, tag = 'input window, operand 2, single buffered']
    #allocation8 [shape = 'u8[1024]{0}', space=vmem, size = 0x400, scoped, tag = 'output window, operand 0, single buffered']
    %9 = vsyncpa [#allocation3], 0
    %10 = vsyncpa [#allocation6], 0
    %11 = vsyncpa [#allocation4], 0
    // Predicated region
    $region2: #{tpu_custom_call.1} parent=1 // pred_check
      _
    $region3: #{tpu_custom_call.1} parent=1 // pred_check_branch
      %13 = sbr.rel (0) target = $region5
    $region4: #{tpu_custom_call.1} parent=1 // pred_region
      %s15 = ssub.s32 32, 32
      %16 = vsyncadd [#allocation3], %s15
      %s18 = sshll.u32 [#allocation2], 4
      %s19 = int_to_ptr.vmem [resolvable:$true] %s18
      %21 = dma.hbm_to_vmem [thread:$0]  %s0, 32, %s19, [#allocation3]
    $region5: #{tpu_custom_call.1} parent=1 // pred_fallthru
      _
    // Predicated region
    $region6: #{tpu_custom_call.1} parent=1 // pred_check
      _
    $region7: #{tpu_custom_call.1} parent=1 // pred_check_branch
      %23 = sbr.rel (0) target = $region9
    $region8: #{tpu_custom_call.1} parent=1 // pred_region
      %s25 = ssub.s32 32, 32
      %26 = vsyncadd [#allocation6], %s25
      %s28 = sshll.u32 [#allocation5], 4
      %s29 = int_to_ptr.vmem [resolvable:$true] %s28
      %31 = dma.hbm_to_vmem [thread:$0]  %s1, 32, %s29, [#allocation6]
    $region9: #{tpu_custom_call.1} parent=1 // pred_fallthru
      _
    // Predicated region
    $region10: #{tpu_custom_call.1} parent=1 // pred_check
      _
    $region11: #{tpu_custom_call.1} parent=1 // pred_check_branch
      %33 = sbr.rel (0) target = $region13
    $region12: #{tpu_custom_call.1} parent=1 // pred_region
      %s35 = ssub.s32 1024, 1024
      %36 = vsyncadd [#allocation6], %s35
      %s37 = sshll.u32 [#allocation7], 4
      %s38 = int_to_ptr.vmem [resolvable:$true] %s37
      %43 = dma.hbm_to_vmem [thread:$0]  %s2, 1024, %s38, [#allocation6], 256, 256, 16
    $region13: #{tpu_custom_call.1} parent=1 // pred_fallthru
      _
    // Predicated region
    $region14: #{tpu_custom_call.1} parent=1 // pred_check
      _
    $region15: #{tpu_custom_call.1} parent=1 // pred_check_branch
      %45 = sbr.rel (0) target = $region17
    $region16: #{tpu_custom_call.1} parent=1 // pred_region
      _
    $region17: #{tpu_custom_call.1} parent=1 // pred_fallthru
      _
    // Predicated region
    $region18: #{tpu_custom_call.1} parent=1 // pred_check
      _
    $region19: #{tpu_custom_call.1} parent=1 // pred_check_branch
      %47 = sbr.rel (0) target = $region21
    $region20: #{tpu_custom_call.1} parent=1 // pred_region
      %48 = dma.done [#allocation3], 32
    $region21: #{tpu_custom_call.1} parent=1 // pred_fallthru
      _
    // Predicated region
    $region22: #{tpu_custom_call.1} parent=1 // pred_check
      _
    $region23: #{tpu_custom_call.1} parent=1 // pred_check_branch
      %50 = sbr.rel (0) target = $region25
    $region24: #{tpu_custom_call.1} parent=1 // pred_region
      %51 = dma.done [#allocation6], 32
    $region25: #{tpu_custom_call.1} parent=1 // pred_fallthru
      _
    // Predicated region
    $region26: #{tpu_custom_call.1} parent=1 // pred_check
      _
    $region27: #{tpu_custom_call.1} parent=1 // pred_check_branch
      %53 = sbr.rel (0) target = $region29
    $region28: #{tpu_custom_call.1} parent=1 // pred_region
      %54 = dma.done [#allocation6], 1024
    $region29: #{tpu_custom_call.1} parent=1 // pred_fallthru
      _
    %v55 = vld [vmem:[#allocation2] sm:$0x3]
    %v56 = vld [vmem:[#allocation5] sm:$0x3]
    %v57 = vld [vmem:[#allocation7] sm:$0xff]
    %v58 = vld [vmem:[#allocation7 + $0x8] sm:$0xff]
    %v59 = vld [vmem:[#allocation7 + $0x10] sm:$0xff]
    %v60 = vld [vmem:[#allocation7 + $0x18] sm:$0xff]
    %v61 = vld [vmem:[#allocation7 + $0x20] sm:$0xff]
    %v62 = vld [vmem:[#allocation7 + $0x28] sm:$0xff]
    %v63 = vld [vmem:[#allocation7 + $0x30] sm:$0xff]
    %v64 = vld [vmem:[#allocation7 + $0x38] sm:$0xff]
    %vm65 = vcmask 261120
    %v67 = vsel %vm65, %v55, 0
    %69 = vmatprep.subr.mxu0 0.0
    %70 = vmatpush1.msra.mxu0 0.0
    %71 = vmatprep.subr.mxu0 0.0
    %72 = vmatpush1.msra.mxu0 0.0
    %73 = vmatprep.subr.mxu0 0.0
    %74 = vmatpush1.msra.mxu0 0.0
    %75 = vmatprep.subr.mxu0 0.0
    %76 = vmatpush1.msra.mxu0 0.0
    %77 = vmatprep.subr.mxu0 0.0
    %78 = vmatpush1.msra.mxu0 0.0
    %79 = vmatprep.subr.mxu0 0.0
    %80 = vmatpush1.msra.mxu0 0.0
    %81 = vmatprep.subr.mxu0 0.0
    %82 = vmatpush1.msra.mxu0 0.0
    %83 = vmatprep.subr.mxu0 0.0
    %84 = vmatpush1.msra.mxu0 0.0
    %85 = vmatprep.subr.mxu0 0.0
    %86 = vmatpush1.msra.mxu0 0.0
    %87 = vmatprep.subr.mxu0 0.0
    %88 = vmatpush1.msra.mxu0 0.0
    %89 = vmatprep.subr.mxu0 0.0
    %90 = vmatpush1.msra.mxu0 0.0
    %91 = vmatprep.subr.mxu0 0.0
    %92 = vmatpush1.msra.mxu0 0.0
    %93 = vmatprep.subr.mxu0 %v64
    %94 = vmatpush1.msra.mxu0 %v63
    %95 = vmatprep.subr.mxu0 %v62
    %96 = vmatpush1.msra.mxu0 %v61
    %97 = vmatprep.subr.mxu0 %v60
    %98 = vmatpush1.msra.mxu0 %v59
    %99 = vmatprep.subr.mxu0 %v58
    %100 = vmatpush1.msra.mxu0 %v57
    %101 = vmatprep.subr.mxu0 0.0
    %102 = vmatpush2.msra.mxu0 0.0
    %103 = vmatprep.subr.mxu0 0.0
    %104 = vmatpush2.msra.mxu0 0.0
    %105 = vmatprep.subr.mxu0 0.0
    %106 = vmatpush2.msra.mxu0 0.0
    %107 = vmatprep.subr.mxu0 0.0
    %108 = vmatpush2.msra.mxu0 0.0
    %109 = vmatprep.subr.mxu0 0.0
    %110 = vmatpush2.msra.mxu0 0.0
    %111 = vmatprep.subr.mxu0 0.0
    %112 = vmatpush2.msra.mxu0 0.0
    %113 = vmatprep.subr.mxu0 0.0
    %114 = vmatpush2.msra.mxu0 0.0
    %115 = vmatprep.subr.mxu0 0.0
    %116 = vmatpush2.msra.mxu0 0.0
    %117 = vmatprep.subr.mxu0 0.0
    %118 = vmatpush2.msra.mxu0 0.0
    %119 = vmatprep.subr.mxu0 0.0
    %120 = vmatpush2.msra.mxu0 0.0
    %121 = vmatprep.subr.mxu0 0.0
    %122 = vmatpush2.msra.mxu0 0.0
    %123 = vmatprep.subr.mxu0 0.0
    %124 = vmatpush2.msra.mxu0 0.0
    %125 = vmatprep.subr.mxu0 0.0
    %126 = vmatpush2.msra.mxu0 0.0
    %127 = vmatprep.subr.mxu0 0.0
    %128 = vmatpush2.msra.mxu0 0.0
    %129 = vmatprep.subr.mxu0 0.0
    %130 = vmatpush2.msra.mxu0 0.0
    %131 = vmatprep.subr.mxu0 0.0
    %132 = vmatpush2.msra.mxu0 0.0
    %133 = vmatprep.mubr.f32.mxu0 0.0
    %134 = vmatmul.mubr.f32.gmra.mxu0 %v67
    %v135 = vpop.f32.mrf.mxu0
    %v136 = vadd.f32 0.0, %v135
    %v137 = vpop.f32.mrf.mxu0
    %v138 = vadd.f32 0.0, %v137
    %139 = vdwg.mxu0
    %v140 = vlaneseq
    %v141 = vand.u32 %v140, 127
    %v142 = vmul.f32 %v136, %v56
    %vm143 = vcmask 254976
    %v144 = vsel %vm143, %v142, 0.0
    %145 = vadd.xlane.f32.xlu0 %v144
    %v146 = vpop.xlane.xlu0 %145
    %vm147 = vcmp.eq.s32.totalorder %v141, 0
    %v148 = vsel %vm147, 1, 0
    %v149 = vcvt.s32.f32 %v148
    %v150 = vmul.f32 %v149, %v146
    %v151 = vadd.f32 %v150, 0.0
    %153 = vrot.lane.b32.xlu0 %v56, 32
    %v154 = vpop.permute.xlu0 %153
    %v156 = vmul.f32 %v136, %v154
    %158 = vrot.lane.b32.xlu0 %v156, 96
    %v159 = vpop.permute.xlu0 %158
    %v161 = vsel %vm143, %v159, 0.0
    %162 = vadd.xlane.f32.xlu0 %v161
    %v163 = vpop.xlane.xlu0 %162
    %vm164 = vcmp.eq.s32.totalorder %v141, 1
    %v165 = vsel %vm164, 1, 0
    %v166 = vcvt.s32.f32 %v165
    %v167 = vmul.f32 %v166, %v163
    %v168 = vadd.f32 %v151, %v167
    %169 = vrot.lane.b32.xlu0 %v56, 64
    %v170 = vpop.permute.xlu0 %169
    %v172 = vmul.f32 %v136, %v170
    %174 = vrot.lane.b32.xlu0 %v172, 64
    %v175 = vpop.permute.xlu0 %174
    %v177 = vsel %vm143, %v175, 0.0
    %178 = vadd.xlane.f32.xlu0 %v177
    %v179 = vpop.xlane.xlu0 %178
    %vm180 = vcmp.eq.s32.totalorder %v141, 2
    %v181 = vsel %vm180, 1, 0
    %v182 = vcvt.s32.f32 %v181
    %v183 = vmul.f32 %v182, %v179
    %v184 = vadd.f32 %v168, %v183
    %185 = vrot.lane.b32.xlu0 %v56, 96
    %v186 = vpop.permute.xlu0 %185
    %v188 = vmul.f32 %v136, %v186
    %190 = vrot.lane.b32.xlu0 %v188, 32
    %v191 = vpop.permute.xlu0 %190
    %v193 = vsel %vm143, %v191, 0.0
    %194 = vadd.xlane.f32.xlu0 %v193
    %v195 = vpop.xlane.xlu0 %194
    %vm196 = vcmp.eq.s32.totalorder %v141, 3
    %v197 = vsel %vm196, 1, 0
    %v198 = vcvt.s32.f32 %v197
    %v199 = vmul.f32 %v198, %v195
    %v200 = vadd.f32 %v184, %v199
    %v201 = vmul.f32 %v138, %v56
    %v202 = vsel %vm143, %v201, 0.0
    %203 = vadd.xlane.f32.xlu0 %v202
    %v204 = vpop.xlane.xlu0 %203
    %vm205 = vcmp.eq.s32.totalorder %v141, 4
    %v206 = vsel %vm205, 1, 0
    %v207 = vcvt.s32.f32 %v206
    %v208 = vmul.f32 %v207, %v204
    %v209 = vadd.f32 %v200, %v208
    %v210 = vmul.f32 %v138, %v154
    %212 = vrot.lane.b32.xlu0 %v210, 96
    %v213 = vpop.permute.xlu0 %212
    %v215 = vsel %vm143, %v213, 0.0
    %216 = vadd.xlane.f32.xlu0 %v215
    %v217 = vpop.xlane.xlu0 %216
    %vm218 = vcmp.eq.s32.totalorder %v141, 5
    %v219 = vsel %vm218, 1, 0
    %v220 = vcvt.s32.f32 %v219
    %v221 = vmul.f32 %v220, %v217
    %v222 = vadd.f32 %v209, %v221
    %v223 = vmul.f32 %v138, %v170
    %225 = vrot.lane.b32.xlu0 %v223, 64
    %v226 = vpop.permute.xlu0 %225
    %v228 = vsel %vm143, %v226, 0.0
    %229 = vadd.xlane.f32.xlu0 %v228
    %v230 = vpop.xlane.xlu0 %229
    %vm231 = vcmp.eq.s32.totalorder %v141, 6
    %v232 = vsel %vm231, 1, 0
    %v233 = vcvt.s32.f32 %v232
    %v234 = vmul.f32 %v233, %v230
    %v235 = vadd.f32 %v222, %v234
    %v236 = vmul.f32 %v138, %v186
    %238 = vrot.lane.b32.xlu0 %v236, 32
    %v239 = vpop.permute.xlu0 %238
    %v241 = vsel %vm143, %v239, 0.0
    %242 = vadd.xlane.f32.xlu0 %v241
    %v243 = vpop.xlane.xlu0 %242
    %vm244 = vcmp.eq.s32.totalorder %v141, 7
    %v245 = vsel %vm244, 1, 0
    %v246 = vcvt.s32.f32 %v245
    %v247 = vmul.f32 %v246, %v243
    %v248 = vadd.f32 %v235, %v247
    %v249 = vld [vmem:[%s3] sm:$0x1]
    %v251 = vlaneseq
    %v252 = vshrl.u32 %v251, 7
    %v253 = vsub.s32 0, %v252
    %v254 = vrot.slane %v249, %v253
    %v256 = vadd.f32 %v248, %v254
    %vm257 = vcmask 58368
    %v258 = vsel %vm257, %v256, -inf
    %259 = vmax.xlane.f32.xlu0 %v258
    %v260 = vpop.xlane.xlu0 %259
    %v261 = vsub.f32 %v256, %v260
    %v262 = vmul.f32 %v261, 1.442695
    %v263 = vpow.pop %v262
    %v264 = vsel %vm257, %v263, 0.0
    %265 = vadd.xlane.f32.xlu0 %v264
    %v266 = vpop.xlane.xlu0 %265
    %v267 = vrcp.pop %v266
    %v268 = vmul.f32 %v263, %v267
    %269 = vst.msk [vmem:[#allocation8] sm:$0x3] %vm257, %v268
    // Predicated region
    $region30: #{tpu_custom_call.1} parent=1 // pred_check
      _
    $region31: #{tpu_custom_call.1} parent=1 // pred_check_branch
      %271 = sbr.rel (0) target = $region33
    $region32: #{tpu_custom_call.1} parent=1 // pred_region
      %s273 = ssub.s32 32, 32
      %274 = vsyncadd [#allocation4], %s273
      %s276 = sshll.u32 [#allocation8], 4
      %s277 = int_to_ptr.vmem [resolvable:$true] %s276
      %279 = dma.vmem_to_hbm [thread:$0]  %s277, 32, %s4, [#allocation4]
    $region33: #{tpu_custom_call.1} parent=1 // pred_fallthru
      _
    // Predicated region
    $region34: #{tpu_custom_call.1} parent=1 // pred_check
      _
    $region35: #{tpu_custom_call.1} parent=1 // pred_check_branch
      %281 = sbr.rel (0) target = $region37
    $region36: #{tpu_custom_call.1} parent=1 // pred_region
      %282 = dma.done [#allocation4], 32
    $region37: #{tpu_custom_call.1} parent=1 // pred_fallthru
      _
    %283 = vsyncpa [#allocation3], 1
    %284 = vsyncpa [#allocation6], 1
    %285 = vsyncpa [#allocation4], 1

</llo_original>
